<compile_context>
chip_gen: v5e
topology: v5e:2x2
jax: 0.10.0
libtpu: 0.0.40
codegen_flags: <defaults>
</compile_context>

<pallas_src>
import jax
import jax.numpy as jnp
from jax import lax
from jax.experimental import pallas as pl
from jax.experimental.pallas import tpu as pltpu

BN_EPS = 1e-5


def _round_up(n, m):
    return ((n + m - 1) // m) * m


def _pick_row_tile(n):
    """Row tile selection: big tiles (512-2048) so each grid step does real
    work, >=2 grid steps (v7x megacore) when N is large, modest pad waste.
    Tiny N -> one full tile (rounded to a sublane multiple)."""
    if n <= 512:
        return _round_up(n, 8)
    for cand in (2048, 1024, 512):
        steps = -(-n // cand)
        if steps >= 2 and steps * cand - n <= cand // 2:
            return cand
    return 512


# ------------------------------ fused kernel ------------------------------- #

def _make_fused_kernel(n_layers):
    """Fused MINE forward: n_layers x (matmul + bias + ReLU) + Dout=1 head."""

    def kernel(*refs):
        f32 = jnp.float32
        xy_ref = refs[0]
        pos = 1
        h = xy_ref[...]                                    # bf16 (TM, Dx+Dy)
        for _ in range(n_layers):
            w_ref, b_ref = refs[pos], refs[pos + 1]
            pos += 2
            z = jnp.dot(h, w_ref[...], preferred_element_type=f32) + b_ref[...]
            h = jnp.maximum(z, 0.0).astype(jnp.bfloat16)   # bias+ReLU in f32
        wo_ref, bo_ref, o_ref = refs[pos], refs[pos + 1], refs[pos + 2]
        # Dout == 1 head as wo @ h^T  -> lane-dense (.., TM) row; wo is padded
        # to 8 rows (rows 1..7 zero) so the MXU operand is sublane-aligned.
        rows = lax.dot_general(
            wo_ref[...], h, (((1,), (1,)), ((), ())),
            preferred_element_type=f32)                    # (8, TM)
        o_ref[...] = rows[0:1, :] + bo_ref[...]            # (1, TM)

    return kernel


# ----------------------------- host-side fusion ---------------------------- #

def _fold_bn(w, b, gamma, beta, mean, var):
    """Fold eval-mode BatchNorm1d into the preceding Linear layer."""
    scale = gamma * lax.rsqrt(var + BN_EPS)
    return w * scale[None, :], (b - mean) * scale + beta


def mine_forward(params, x, y):
    """Fused Pallas forward.  x: [B,S,x_dim], y: [B,S,y_dim] -> [B*S, 1]."""
    B, S, Dx = x.shape
    N = B * S
    x_flat = x.reshape(N, Dx).astype(jnp.float32)
    y_flat = y.reshape(N, -1).astype(jnp.float32)
    Dy = y_flat.shape[1]
    Dxy = Dx + Dy

    # Fold eval-mode BN into every Linear.
    wx, bx = _fold_bn(*params["x_proj"])
    wy, by = _fold_bn(*params["y_proj"])
    mlp = [_fold_bn(*layer) for layer in params["mlp"]]

    # Fuse the two projections into one block-diagonal layer; the concat then
    # disappears and the first MLP weight stays un-split.
    Px, Py = wx.shape[1], wy.shape[1]
    wblk = jnp.zeros((Dxy, Px + Py), jnp.float32)
    wblk = wblk.at[:Dx, :Px].set(wx).at[Dx:, Px:].set(wy)
    bblk = jnp.concatenate([bx, by])

    layers = [(wblk, bblk)] + mlp
    n_layers = len(layers)

    # Output head: pad to 8 rows (rows 1..7 zero) for sublane alignment.
    wo = params["out_w"].reshape(1, -1)                    # (1, H_last)
    Hl = wo.shape[1]
    wo8 = jnp.zeros((8, Hl), jnp.float32).at[0:1, :].set(wo)
    bo = params["out_b"].reshape(1, 1).astype(jnp.float32)

    # Single bf16 input slab (halves input DMA bytes, one tile per step).
    xy = jnp.concatenate([x_flat, y_flat], axis=1).astype(jnp.bfloat16)

    TM = _pick_row_tile(N)
    Np = _round_up(N, TM)
    if Np != N:
        xy = jnp.pad(xy, ((0, Np - N), (0, 0)))
    grid = (Np // TM,)

    weight_ops = []
    for w, b in layers:
        weight_ops += [w.astype(jnp.bfloat16),
                       b.reshape(1, -1).astype(jnp.float32)]
    weight_ops += [wo8.astype(jnp.bfloat16), bo]

    def full_spec(a):
        # Full-array block, constant index_map -> DMA'd once, VMEM resident.
        return pl.BlockSpec(a.shape, lambda i: (0, 0))

    in_specs = [pl.BlockSpec((TM, Dxy), lambda i: (i, 0))]
    in_specs += [full_spec(a) for a in weight_ops]

    # Explicit scoped-VMEM limit: estimated working set x2, capped at 48 MiB
    # (v7x has 64 MiB physical VMEM; v5e default is only 16 MiB).
    max_w = max(int(w.shape[1]) for w, _ in layers)
    w_bytes = sum(int(a.size) * a.dtype.itemsize for a in weight_ops)
    est = w_bytes + 2 * TM * Dxy * 2 + 2 * TM * 4 + 6 * TM * max_w * 4
    vmem_limit = int(min(48 << 20, max(16 << 20, 2 * est)))

    out = pl.pallas_call(
        _make_fused_kernel(n_layers),
        out_shape=jax.ShapeDtypeStruct((1, Np), jnp.float32),
        grid_spec=pltpu.PrefetchScalarGridSpec(
            num_scalar_prefetch=0,
            grid=grid,
            in_specs=in_specs,
            out_specs=pl.BlockSpec((1, TM), lambda i: (0, i)),
        ),
        compiler_params=pltpu.CompilerParams(
            dimension_semantics=("parallel",),
            vmem_limit_bytes=vmem_limit),
    )(xy, *weight_ops)
    return out.reshape(Np, 1)[:N]


# --------------------------- parameter construction ------------------------ #

def _init_linear(key, din, dout, std=None):
    kw, _ = jax.random.split(key)
    if std is None:
        std = (2.0 / (din + dout)) ** 0.5  # xavier-ish, deterministic
    w = std * jax.random.normal(kw, (din, dout), dtype=jnp.float32)
    b = jnp.zeros((dout,), dtype=jnp.float32)
    return w, b


def _init_bn(key, dout):
    gamma = jnp.ones((dout,), dtype=jnp.float32)
    beta = jnp.zeros((dout,), dtype=jnp.float32)
    mean = 0.01 * jax.random.normal(key, (dout,), dtype=jnp.float32)
    var = jnp.ones((dout,), dtype=jnp.float32) + 0.05 * jnp.abs(
        jax.random.normal(jax.random.fold_in(key, 1), (dout,),
                          dtype=jnp.float32))
    return gamma, beta, mean, var


def init_mine_params(key, x_dim, y_dim, x_proj_dim, y_proj_dim, hidden_dims):
    keys = jax.random.split(key, 4 + 2 * len(hidden_dims))
    params = {}
    wx, bx = _init_linear(keys[0], x_dim, x_proj_dim)
    params["x_proj"] = (wx, bx) + _init_bn(keys[1], x_proj_dim)
    wy, by = _init_linear(keys[2], y_dim, y_proj_dim)
    params["y_proj"] = (wy, by) + _init_bn(keys[3], y_proj_dim)
    mlp = []
    prev = x_proj_dim + y_proj_dim
    for i, d in enumerate(hidden_dims):
        w, b = _init_linear(keys[4 + 2 * i], prev, d)
        mlp.append((w, b) + _init_bn(keys[5 + 2 * i], d))
        prev = d
    params["mlp"] = tuple(mlp)
    # output layer: normal(std=0.01), bias=0 (matches module init)
    kout = jax.random.fold_in(key, 999)
    params["out_w"] = 0.01 * jax.random.normal(kout, (prev, 1),
                                               dtype=jnp.float32)
    params["out_b"] = jnp.zeros((1,), dtype=jnp.float32)
    return params


# ------------------------------ pure-JAX reference -------------------------- #

def mine_forward_ref(params, x, y):
    """Unfused, unfolded f32 (Linear -> BN(eval) -> ReLU) reference."""
    def lbr(h, w, b, g, beta, m, v):
        z = h @ w + b
        z = (z - m) * (g / jnp.sqrt(v + BN_EPS)) + beta
        return jnp.maximum(z, 0.0)

    B, S, Dx = x.shape
    x_flat = x.reshape(B * S, Dx)
    y_flat = y.reshape(B * S, -1)
    xp = lbr(x_flat, *params["x_proj"])
    yp = lbr(y_flat, *params["y_proj"])
    h = jnp.concatenate([xp, yp], axis=1)
    for layer in params["mlp"]:
        h = lbr(h, *layer)
    return h @ params["out_w"] + params["out_b"]


# ---------------------------------- main ------------------------------------ #

if __name__ == "__main__":
    x_dim, y_dim = 16, 16
    x_proj_dim, y_proj_dim = 32, 32
    hidden_dims = [128, 128, 64]

    key = jax.random.PRNGKey(0)
    kp, kx, ky, kx2, ky2 = jax.random.split(key, 5)
    params = init_mine_params(kp, x_dim, y_dim, x_proj_dim, y_proj_dim,
                              hidden_dims)

    fwd = jax.jit(mine_forward)

    # Small case: single-tile path.
    B, S = 2, 8
    x = jax.random.normal(kx, (B, S, x_dim), dtype=jnp.float32)
    y = jax.random.normal(ky, (B, S, y_dim), dtype=jnp.float32)
    out = jax.block_until_ready(fwd(params, x, y))
    ref = mine_forward_ref(params, x, y)
    assert out.shape == (B * S, 1), out.shape
    err = float(jnp.max(jnp.abs(out - ref)))
    assert err < 2e-2, err   # bf16 MXU operands vs f32 reference

    # Larger case: multi-step grid + ragged-tail padding path (TM=512, grid=2).
    B2, S2 = 5, 120
    x2 = jax.random.normal(kx2, (B2, S2, x_dim), dtype=jnp.float32)
    y2 = jax.random.normal(ky2, (B2, S2, y_dim), dtype=jnp.float32)
    out2 = jax.block_until_ready(fwd(params, x2, y2))
    ref2 = mine_forward_ref(params, x2, y2)
    assert out2.shape == (B2 * S2, 1), out2.shape
    err2 = float(jnp.max(jnp.abs(out2 - ref2)))
    assert err2 < 2e-2, err2

    print("KERNEL_OK")
</pallas_src>

<mosaic_0001>
module attributes {stable_mosaic.version = 11 : i64} {
  func.func @kernel(%arg0: i32, %arg1: memref<16x32xbf16, #tpu.memory_space<vmem>>, %arg2: memref<32x64xbf16, #tpu.memory_space<vmem>>, %arg3: memref<1x64xf32, #tpu.memory_space<vmem>>, %arg4: memref<64x128xbf16, #tpu.memory_space<vmem>>, %arg5: memref<1x128xf32, #tpu.memory_space<vmem>>, %arg6: memref<128x128xbf16, #tpu.memory_space<vmem>>, %arg7: memref<1x128xf32, #tpu.memory_space<vmem>>, %arg8: memref<128x64xbf16, #tpu.memory_space<vmem>>, %arg9: memref<1x64xf32, #tpu.memory_space<vmem>>, %arg10: memref<8x64xbf16, #tpu.memory_space<vmem>>, %arg11: memref<1x1xf32, #tpu.memory_space<vmem>>, %arg12: memref<1x16xf32, #tpu.memory_space<vmem>>) attributes {dimension_semantics = [#tpu.dimension_semantics<parallel>], iteration_bounds = array<i64: 1>, scalar_prefetch = 0 : i64, scratch_operands = 0 : i64, tpu.core_type = #tpu.core_type<tc>, window_params = [{transform_indices = @transform_0, window_bounds = array<i64: 16, 32>}, {pipeline_mode = #tpu.pipeline_mode<synchronous>, transform_indices = @transform_1, window_bounds = array<i64: 32, 64>}, {pipeline_mode = #tpu.pipeline_mode<synchronous>, transform_indices = @transform_2, window_bounds = array<i64: 1, 64>}, {pipeline_mode = #tpu.pipeline_mode<synchronous>, transform_indices = @transform_3, window_bounds = array<i64: 64, 128>}, {pipeline_mode = #tpu.pipeline_mode<synchronous>, transform_indices = @transform_4, window_bounds = array<i64: 1, 128>}, {pipeline_mode = #tpu.pipeline_mode<synchronous>, transform_indices = @transform_5, window_bounds = array<i64: 128, 128>}, {pipeline_mode = #tpu.pipeline_mode<synchronous>, transform_indices = @transform_6, window_bounds = array<i64: 1, 128>}, {pipeline_mode = #tpu.pipeline_mode<synchronous>, transform_indices = @transform_7, window_bounds = array<i64: 128, 64>}, {pipeline_mode = #tpu.pipeline_mode<synchronous>, transform_indices = @transform_8, window_bounds = array<i64: 1, 64>}, {pipeline_mode = #tpu.pipeline_mode<synchronous>, transform_indices = @transform_9, window_bounds = array<i64: 8, 64>}, {pipeline_mode = #tpu.pipeline_mode<synchronous>, transform_indices = @transform_10, window_bounds = array<i64: 1, 1>}, {transform_indices = @transform_11, window_bounds = array<i64: 1, 16>}]} {
    %c0 = arith.constant 0 : index
    %c0_0 = arith.constant 0 : index
    %0 = vector.load %arg1[%c0, %c0_0] : memref<16x32xbf16, #tpu.memory_space<vmem>>, vector<16x32xbf16>
    %c0_1 = arith.constant 0 : index
    %c0_2 = arith.constant 0 : index
    %1 = vector.load %arg2[%c0_1, %c0_2] : memref<32x64xbf16, #tpu.memory_space<vmem>>, vector<32x64xbf16>
    %cst = arith.constant dense<0.000000e+00> : vector<16x64xf32>
    %2 = tpu.matmul %0, %1, %cst {dimension_numbers = #tpu.dot_dimension_numbers<[1], [0], [0], [1], [0, 0, 1, 1], [], []>} : vector<16x32xbf16>, vector<32x64xbf16>, vector<16x64xf32> -> vector<16x64xf32>
    %c0_3 = arith.constant 0 : index
    %c0_4 = arith.constant 0 : index
    %3 = vector.load %arg3[%c0_3, %c0_4] : memref<1x64xf32, #tpu.memory_space<vmem>>, vector<1x64xf32>
    %4 = vector.broadcast %3 : vector<1x64xf32> to vector<16x64xf32>
    %5 = arith.addf %2, %4 : vector<16x64xf32>
    %cst_5 = arith.constant 0.000000e+00 : f32
    %6 = vector.broadcast %cst_5 : f32 to vector<16x64xf32>
    %7 = arith.maximumf %5, %6 : vector<16x64xf32>
    %8 = arith.truncf %7 : vector<16x64xf32> to vector<16x64xbf16>
    %c0_6 = arith.constant 0 : index
    %c0_7 = arith.constant 0 : index
    %9 = vector.load %arg4[%c0_6, %c0_7] : memref<64x128xbf16, #tpu.memory_space<vmem>>, vector<64x128xbf16>
    %cst_8 = arith.constant dense<0.000000e+00> : vector<16x128xf32>
    %10 = tpu.matmul %8, %9, %cst_8 {dimension_numbers = #tpu.dot_dimension_numbers<[1], [0], [0], [1], [0, 0, 1, 1], [], []>} : vector<16x64xbf16>, vector<64x128xbf16>, vector<16x128xf32> -> vector<16x128xf32>
    %c0_9 = arith.constant 0 : index
    %c0_10 = arith.constant 0 : index
    %11 = vector.load %arg5[%c0_9, %c0_10] : memref<1x128xf32, #tpu.memory_space<vmem>>, vector<1x128xf32>
    %12 = vector.broadcast %11 : vector<1x128xf32> to vector<16x128xf32>
    %13 = arith.addf %10, %12 : vector<16x128xf32>
    %cst_11 = arith.constant 0.000000e+00 : f32
    %14 = vector.broadcast %cst_11 : f32 to vector<16x128xf32>
    %15 = arith.maximumf %13, %14 : vector<16x128xf32>
    %16 = arith.truncf %15 : vector<16x128xf32> to vector<16x128xbf16>
    %c0_12 = arith.constant 0 : index
    %c0_13 = arith.constant 0 : index
    %17 = vector.load %arg6[%c0_12, %c0_13] : memref<128x128xbf16, #tpu.memory_space<vmem>>, vector<128x128xbf16>
    %cst_14 = arith.constant dense<0.000000e+00> : vector<16x128xf32>
    %18 = tpu.matmul %16, %17, %cst_14 {dimension_numbers = #tpu.dot_dimension_numbers<[1], [0], [0], [1], [0, 0, 1, 1], [], []>} : vector<16x128xbf16>, vector<128x128xbf16>, vector<16x128xf32> -> vector<16x128xf32>
    %c0_15 = arith.constant 0 : index
    %c0_16 = arith.constant 0 : index
    %19 = vector.load %arg7[%c0_15, %c0_16] : memref<1x128xf32, #tpu.memory_space<vmem>>, vector<1x128xf32>
    %20 = vector.broadcast %19 : vector<1x128xf32> to vector<16x128xf32>
    %21 = arith.addf %18, %20 : vector<16x128xf32>
    %cst_17 = arith.constant 0.000000e+00 : f32
    %22 = vector.broadcast %cst_17 : f32 to vector<16x128xf32>
    %23 = arith.maximumf %21, %22 : vector<16x128xf32>
    %24 = arith.truncf %23 : vector<16x128xf32> to vector<16x128xbf16>
    %c0_18 = arith.constant 0 : index
    %c0_19 = arith.constant 0 : index
    %25 = vector.load %arg8[%c0_18, %c0_19] : memref<128x64xbf16, #tpu.memory_space<vmem>>, vector<128x64xbf16>
    %cst_20 = arith.constant dense<0.000000e+00> : vector<16x64xf32>
    %26 = tpu.matmul %24, %25, %cst_20 {dimension_numbers = #tpu.dot_dimension_numbers<[1], [0], [0], [1], [0, 0, 1, 1], [], []>} : vector<16x128xbf16>, vector<128x64xbf16>, vector<16x64xf32> -> vector<16x64xf32>
    %c0_21 = arith.constant 0 : index
    %c0_22 = arith.constant 0 : index
    %27 = vector.load %arg9[%c0_21, %c0_22] : memref<1x64xf32, #tpu.memory_space<vmem>>, vector<1x64xf32>
    %28 = vector.broadcast %27 : vector<1x64xf32> to vector<16x64xf32>
    %29 = arith.addf %26, %28 : vector<16x64xf32>
    %cst_23 = arith.constant 0.000000e+00 : f32
    %30 = vector.broadcast %cst_23 : f32 to vector<16x64xf32>
    %31 = arith.maximumf %29, %30 : vector<16x64xf32>
    %32 = arith.truncf %31 : vector<16x64xf32> to vector<16x64xbf16>
    %c0_24 = arith.constant 0 : index
    %c0_25 = arith.constant 0 : index
    %33 = vector.load %arg10[%c0_24, %c0_25] : memref<8x64xbf16, #tpu.memory_space<vmem>>, vector<8x64xbf16>
    %cst_26 = arith.constant dense<0.000000e+00> : vector<8x16xf32>
    %34 = tpu.matmul %33, %32, %cst_26 {dimension_numbers = #tpu.dot_dimension_numbers<[1], [1], [0], [0], [0, 0, 1, 0], [], []>} : vector<8x64xbf16>, vector<16x64xbf16>, vector<8x16xf32> -> vector<8x16xf32>
    %35 = vector.extract_strided_slice %34 {offsets = [0, 0], sizes = [1, 16], strides = [1, 1]} : vector<8x16xf32> to vector<1x16xf32>
    %c0_27 = arith.constant 0 : index
    %c0_28 = arith.constant 0 : index
    %36 = vector.load %arg11[%c0_27, %c0_28] : memref<1x1xf32, #tpu.memory_space<vmem>>, vector<1x1xf32>
    %37 = vector.broadcast %36 : vector<1x1xf32> to vector<1x16xf32>
    %38 = arith.addf %35, %37 : vector<1x16xf32>
    %c0_29 = arith.constant 0 : index
    %c0_30 = arith.constant 0 : index
    %39 = vector.load %arg12[%c0_29, %c0_30] : memref<1x16xf32, #tpu.memory_space<vmem>>, vector<1x16xf32>
    tpu.vector_store %arg12[%c0_29, %c0_30], %38 {strides = array<i32>} : memref<1x16xf32, #tpu.memory_space<vmem>>, vector<1x16xf32>,
    return
  }
  func.func @transform_0(%arg0: i32) -> (i32, i32) {
    %c0_i32 = arith.constant 0 : i32
    %c0_i32_0 = arith.constant 0 : i32
    return %arg0, %c0_i32 : i32, i32
  }
  func.func @transform_1(%arg0: i32) -> (i32, i32) {
    %c0_i32 = arith.constant 0 : i32
    %c0_i32_0 = arith.constant 0 : i32
    %c0_i32_1 = arith.constant 0 : i32
    return %c0_i32, %c0_i32_0 : i32, i32
  }
  func.func @transform_2(%arg0: i32) -> (i32, i32) {
    %c0_i32 = arith.constant 0 : i32
    %c0_i32_0 = arith.constant 0 : i32
    %c0_i32_1 = arith.constant 0 : i32
    return %c0_i32, %c0_i32_0 : i32, i32
  }
  func.func @transform_3(%arg0: i32) -> (i32, i32) {
    %c0_i32 = arith.constant 0 : i32
    %c0_i32_0 = arith.constant 0 : i32
    %c0_i32_1 = arith.constant 0 : i32
    return %c0_i32, %c0_i32_0 : i32, i32
  }
  func.func @transform_4(%arg0: i32) -> (i32, i32) {
    %c0_i32 = arith.constant 0 : i32
    %c0_i32_0 = arith.constant 0 : i32
    %c0_i32_1 = arith.constant 0 : i32
    return %c0_i32, %c0_i32_0 : i32, i32
  }
  func.func @transform_5(%arg0: i32) -> (i32, i32) {
    %c0_i32 = arith.constant 0 : i32
    %c0_i32_0 = arith.constant 0 : i32
    %c0_i32_1 = arith.constant 0 : i32
    return %c0_i32, %c0_i32_0 : i32, i32
  }
  func.func @transform_6(%arg0: i32) -> (i32, i32) {
    %c0_i32 = arith.constant 0 : i32
    %c0_i32_0 = arith.constant 0 : i32
    %c0_i32_1 = arith.constant 0 : i32
    return %c0_i32, %c0_i32_0 : i32, i32
  }
  func.func @transform_7(%arg0: i32) -> (i32, i32) {
    %c0_i32 = arith.constant 0 : i32
    %c0_i32_0 = arith.constant 0 : i32
    %c0_i32_1 = arith.constant 0 : i32
    return %c0_i32, %c0_i32_0 : i32, i32
  }
  func.func @transform_8(%arg0: i32) -> (i32, i32) {
    %c0_i32 = arith.constant 0 : i32
    %c0_i32_0 = arith.constant 0 : i32
    %c0_i32_1 = arith.constant 0 : i32
    return %c0_i32, %c0_i32_0 : i32, i32
  }
  func.func @transform_9(%arg0: i32) -> (i32, i32) {
    %c0_i32 = arith.constant 0 : i32
    %c0_i32_0 = arith.constant 0 : i32
    %c0_i32_1 = arith.constant 0 : i32
    return %c0_i32, %c0_i32_0 : i32, i32
  }
  func.func @transform_10(%arg0: i32) -> (i32, i32) {
    %c0_i32 = arith.constant 0 : i32
    %c0_i32_0 = arith.constant 0 : i32
    %c0_i32_1 = arith.constant 0 : i32
    return %c0_i32, %c0_i32_0 : i32, i32
  }
  func.func @transform_11(%arg0: i32) -> (i32, i32) {
    %c0_i32 = arith.constant 0 : i32
    %c0_i32_0 = arith.constant 0 : i32
    return %c0_i32, %arg0 : i32, i32
  }
}

</mosaic_0001>

<llo_original>
// kernel: mine_forward.1
$region0: #{mine_forward.1}
  #allocation0 [shape = 'u32[]', space=smem, size = 0x4, offset = 0x4, fixed_abs, tag = 'smem constant byte address 0x4 - core index']
  #allocation1 [shape = 'u32[72,128]{1,0:T(1,128)}', space=vmem, size = 0x9000, scoped, tag = 'internal scratch']
  #allocation2 [shape = 'f32[1,1]{1,0:T(1,128)S(1)}', space=vmem, size = 0x200, scoped, tag = 'scoped memory for mine_forward.1']
  %s0 = inlined_call_operand.vmem [shape: bf16[16,32], index: 0, kind: input, shape index: {}]
  %s1 = inlined_call_operand.vmem [shape: bf16[32,64], index: 1, kind: input, shape index: {}]
  %s2 = inlined_call_operand.vmem [shape: f32[1,64], index: 2, kind: input, shape index: {}]
  %s3 = inlined_call_operand.vmem [shape: bf16[64,128], index: 3, kind: input, shape index: {}]
  %s4 = inlined_call_operand.vmem [shape: f32[1,128], index: 4, kind: input, shape index: {}]
  %s5 = inlined_call_operand.vmem [shape: bf16[128,128], index: 5, kind: input, shape index: {}]
  %s6 = inlined_call_operand.vmem [shape: f32[1,128], index: 6, kind: input, shape index: {}]
  %s7 = inlined_call_operand.vmem [shape: bf16[128,64], index: 7, kind: input, shape index: {}]
  %s8 = inlined_call_operand.vmem [shape: f32[1,64], index: 8, kind: input, shape index: {}]
  %s9 = inlined_call_operand.vmem [shape: bf16[8,64], index: 9, kind: input, shape index: {}]
  %s10 = inlined_call_operand.<no memory space> [shape: f32[1,1], index: 10, kind: input, shape index: {}]
  %s11 = inlined_call_operand.hbm [shape: f32[1,16], index: 11, kind: output, shape index: {}]
  %s12 = sld [smem:[#allocation0]]
  $region54: #{mine_forward.1} parent=0
    _
  %s14 = ssub.s32 1, %s12
  %s15 = scalar_select 0, %s14, %s12
  %v16 = vstv %s10
  %17 = vst [vmem:[#allocation2] sm:$0x1] %v16
  $region1: #{mine_forward.1} parent=0
    #allocation3 [shape = 'u8[512]{0}', space=vmem, size = 0x400, scoped, tag = 'output window, operand 0, single buffered']
    #allocation4 [shape = 's32[1]{0}', space=sflag, size = 0x4, scoped, tag = 'scoped memory for mine_forward.1']
    %18 = vsyncpa [#allocation4], 0
    // Predicated region
    $region2: #{mine_forward.1} parent=1 // pred_check
      _
    $region3: #{mine_forward.1} parent=1 // pred_check_branch
      %20 = sbr.rel (0) target = $region5
    $region4: #{mine_forward.1} parent=1 // pred_region
      _
    $region5: #{mine_forward.1} parent=1 // pred_fallthru
      _
    // Predicated region
    $region6: #{mine_forward.1} parent=1 // pred_check
      _
    $region7: #{mine_forward.1} parent=1 // pred_check_branch
      %22 = sbr.rel (0) target = $region9
    $region8: #{mine_forward.1} parent=1 // pred_region
      _
    $region9: #{mine_forward.1} parent=1 // pred_fallthru
      _
    // Predicated region
    $region10: #{mine_forward.1} parent=1 // pred_check
      _
    $region11: #{mine_forward.1} parent=1 // pred_check_branch
      %24 = sbr.rel (0) target = $region13
    $region12: #{mine_forward.1} parent=1 // pred_region
      _
    $region13: #{mine_forward.1} parent=1 // pred_fallthru
      _
    // Predicated region
    $region14: #{mine_forward.1} parent=1 // pred_check
      _
    $region15: #{mine_forward.1} parent=1 // pred_check_branch
      %26 = sbr.rel (0) target = $region17
    $region16: #{mine_forward.1} parent=1 // pred_region
      _
    $region17: #{mine_forward.1} parent=1 // pred_fallthru
      _
    // Predicated region
    $region18: #{mine_forward.1} parent=1 // pred_check
      _
    $region19: #{mine_forward.1} parent=1 // pred_check_branch
      %28 = sbr.rel (0) target = $region21
    $region20: #{mine_forward.1} parent=1 // pred_region
      _
    $region21: #{mine_forward.1} parent=1 // pred_fallthru
      _
    // Predicated region
    $region22: #{mine_forward.1} parent=1 // pred_check
      _
    $region23: #{mine_forward.1} parent=1 // pred_check_branch
      %30 = sbr.rel (0) target = $region25
    $region24: #{mine_forward.1} parent=1 // pred_region
      _
    $region25: #{mine_forward.1} parent=1 // pred_fallthru
      _
    // Predicated region
    $region26: #{mine_forward.1} parent=1 // pred_check
      _
    $region27: #{mine_forward.1} parent=1 // pred_check_branch
      %32 = sbr.rel (0) target = $region29
    $region28: #{mine_forward.1} parent=1 // pred_region
      _
    $region29: #{mine_forward.1} parent=1 // pred_fallthru
      _
    // Predicated region
    $region30: #{mine_forward.1} parent=1 // pred_check
      _
    $region31: #{mine_forward.1} parent=1 // pred_check_branch
      %34 = sbr.rel (0) target = $region33
    $region32: #{mine_forward.1} parent=1 // pred_region
      _
    $region33: #{mine_forward.1} parent=1 // pred_fallthru
      _
    // Predicated region
    $region34: #{mine_forward.1} parent=1 // pred_check
      _
    $region35: #{mine_forward.1} parent=1 // pred_check_branch
      %36 = sbr.rel (0) target = $region37
    $region36: #{mine_forward.1} parent=1 // pred_region
      _
    $region37: #{mine_forward.1} parent=1 // pred_fallthru
      _
    // Predicated region
    $region38: #{mine_forward.1} parent=1 // pred_check
      _
    $region39: #{mine_forward.1} parent=1 // pred_check_branch
      %38 = sbr.rel (0) target = $region41
    $region40: #{mine_forward.1} parent=1 // pred_region
      _
    $region41: #{mine_forward.1} parent=1 // pred_fallthru
      _
    // Predicated region
    $region42: #{mine_forward.1} parent=1 // pred_check
      _
    $region43: #{mine_forward.1} parent=1 // pred_check_branch
      %40 = sbr.rel (0) target = $region45
    $region44: #{mine_forward.1} parent=1 // pred_region
      _
    $region45: #{mine_forward.1} parent=1 // pred_fallthru
      _
    %v42 = vld [vmem:[%s0] sm:$0xf]
    %v43 = vld [vmem:[%s0 + $0x4] sm:$0xf]
    %v44 = vld [vmem:[%s1] sm:$0xf]
    %v45 = vld [vmem:[%s1 + $0x4] sm:$0xf]
    %v46 = vld [vmem:[%s1 + $0x8] sm:$0xf]
    %v47 = vld [vmem:[%s1 + $0xc] sm:$0xf]
    %v48 = vld [vmem:[%s2] sm:$0x1]
    %v50 = vperm.slane %v48, 0
    %v54 = vunpack.c.l.b16 %v42
    %v55 = vunpack.c.l.b16 %v43
    %v56 = vpack.c.b16 %v55, %v54
    %v61 = vunpack.c.l.b16 %v44
    %v62 = vunpack.c.l.b16 %v45
    %v63 = vunpack.c.l.b16 %v46
    %v64 = vunpack.c.l.b16 %v47
    %v65 = vpack.c.b16 %v62, %v61
    %v66 = vpack.c.b16 %v64, %v63
    %vm69 = vcmask 261120
    %v71 = vsel %vm69, %v56, 0
    %73 = vmatpush.bf16.msra.mxu0 0
    %74 = vmatpush.bf16.msra.mxu0 0
    %75 = vmatpush.bf16.msra.mxu0 0
    %76 = vmatpush.bf16.msra.mxu0 0
    %77 = vmatpush.bf16.msra.mxu0 0
    %78 = vmatpush.bf16.msra.mxu0 0
    %79 = vmatpush.bf16.msra.mxu0 %v66
    %80 = vmatpush.bf16.msra.mxu0 %v65
    %81 = vmatmul.bf16.gmra.mxu0 %v71
    %v82 = vpop.f32.mrf.mxu0
    %v83 = vadd.f32 %v50, %v82
    %v84 = vpop.f32.mrf.mxu0
    %v85 = vadd.f32 %v50, %v84
    %86 = vdwg.mxu0
    %v87 = vmax.f32 %v83, 0.0
    %v88 = vmax.f32 %v85, 0.0
    %v89 = vpack.c.bf16 %v88, %v87
    %v90 = vld [vmem:[%s3] sm:$0xf]
    %v91 = vld [vmem:[%s3 + $0x4] sm:$0xf]
    %v92 = vld [vmem:[%s3 + $0x8] sm:$0xf]
    %v93 = vld [vmem:[%s3 + $0xc] sm:$0xf]
    %v94 = vld [vmem:[%s3 + $0x10] sm:$0xf]
    %v95 = vld [vmem:[%s3 + $0x14] sm:$0xf]
    %v96 = vld [vmem:[%s3 + $0x18] sm:$0xf]
    %v97 = vld [vmem:[%s3 + $0x1c] sm:$0xf]
    %v98 = vld [vmem:[%s4] sm:$0x1]
    %v100 = vperm.slane %v98, 0
    %v110 = vunpack.c.l.b16 %v90
    %v111 = vunpack.c.l.b16 %v91
    %v112 = vunpack.c.l.b16 %v92
    %v113 = vunpack.c.l.b16 %v93
    %v114 = vunpack.c.l.b16 %v94
    %v115 = vunpack.c.l.b16 %v95
    %v116 = vunpack.c.l.b16 %v96
    %v117 = vunpack.c.l.b16 %v97
    %v118 = vpack.c.b16 %v111, %v110
    %v119 = vpack.c.b16 %v113, %v112
    %v120 = vpack.c.b16 %v115, %v114
    %v121 = vpack.c.b16 %v117, %v116
    %vm126 = vcmask 523264
    %v128 = vsel %vm126, %v89, 0
    %130 = vmatpush.bf16.msra.mxu0 0
    %131 = vmatpush.bf16.msra.mxu0 0
    %132 = vmatpush.bf16.msra.mxu0 0
    %133 = vmatpush.bf16.msra.mxu0 0
    %134 = vmatpush.bf16.msra.mxu0 %v121
    %135 = vmatpush.bf16.msra.mxu0 %v120
    %136 = vmatpush.bf16.msra.mxu0 %v119
    %137 = vmatpush.bf16.msra.mxu0 %v118
    %138 = vmatmul.bf16.gmra.mxu0 %v128
    %v139 = vpop.f32.mrf.mxu0
    %v140 = vadd.f32 %v100, %v139
    %v141 = vpop.f32.mrf.mxu0
    %v142 = vadd.f32 %v100, %v141
    %143 = vdwg.mxu0
    %v144 = vmax.f32 %v140, 0.0
    %v145 = vmax.f32 %v142, 0.0
    %v146 = vpack.c.bf16 %v145, %v144
    %v147 = vld [vmem:[%s5] sm:$0xf]
    %v148 = vld [vmem:[%s5 + $0x4] sm:$0xf]
    %v149 = vld [vmem:[%s5 + $0x8] sm:$0xf]
    %v150 = vld [vmem:[%s5 + $0xc] sm:$0xf]
    %v151 = vld [vmem:[%s5 + $0x10] sm:$0xf]
    %v152 = vld [vmem:[%s5 + $0x14] sm:$0xf]
    %v153 = vld [vmem:[%s5 + $0x18] sm:$0xf]
    %v154 = vld [vmem:[%s5 + $0x1c] sm:$0xf]
    %v155 = vld [vmem:[%s5 + $0x20] sm:$0xf]
    %v156 = vld [vmem:[%s5 + $0x24] sm:$0xf]
    %v157 = vld [vmem:[%s5 + $0x28] sm:$0xf]
    %v158 = vld [vmem:[%s5 + $0x2c] sm:$0xf]
    %v159 = vld [vmem:[%s5 + $0x30] sm:$0xf]
    %v160 = vld [vmem:[%s5 + $0x34] sm:$0xf]
    %v161 = vld [vmem:[%s5 + $0x38] sm:$0xf]
    %v162 = vld [vmem:[%s5 + $0x3c] sm:$0xf]
    %v163 = vld [vmem:[%s6] sm:$0x1]
    %v165 = vperm.slane %v163, 0
    %v183 = vunpack.c.l.b16 %v147
    %v184 = vunpack.c.l.b16 %v148
    %v185 = vunpack.c.l.b16 %v149
    %v186 = vunpack.c.l.b16 %v150
    %v187 = vunpack.c.l.b16 %v151
    %v188 = vunpack.c.l.b16 %v152
    %v189 = vunpack.c.l.b16 %v153
    %v190 = vunpack.c.l.b16 %v154
    %v191 = vunpack.c.l.b16 %v155
    %v192 = vunpack.c.l.b16 %v156
    %v193 = vunpack.c.l.b16 %v157
    %v194 = vunpack.c.l.b16 %v158
    %v195 = vunpack.c.l.b16 %v159
    %v196 = vunpack.c.l.b16 %v160
    %v197 = vunpack.c.l.b16 %v161
    %v198 = vunpack.c.l.b16 %v162
    %v199 = vpack.c.b16 %v184, %v183
    %v200 = vpack.c.b16 %v186, %v185
    %v201 = vpack.c.b16 %v188, %v187
    %v202 = vpack.c.b16 %v190, %v189
    %v203 = vpack.c.b16 %v192, %v191
    %v204 = vpack.c.b16 %v194, %v193
    %v205 = vpack.c.b16 %v196, %v195
    %v206 = vpack.c.b16 %v198, %v197
    %215 = vmatpush.bf16.msra.mxu0 %v206
    %216 = vmatpush.bf16.msra.mxu0 %v205
    %217 = vmatpush.bf16.msra.mxu0 %v204
    %218 = vmatpush.bf16.msra.mxu0 %v203
    %219 = vmatpush.bf16.msra.mxu0 %v202
    %220 = vmatpush.bf16.msra.mxu0 %v201
    %221 = vmatpush.bf16.msra.mxu0 %v200
    %222 = vmatpush.bf16.msra.mxu0 %v199
    %223 = vmatmul.bf16.gmra.mxu0 %v146
    %v224 = vpop.f32.mrf.mxu0
    %v225 = vadd.f32 %v165, %v224
    %v226 = vpop.f32.mrf.mxu0
    %v227 = vadd.f32 %v165, %v226
    %228 = vdwg.mxu0
    %v229 = vmax.f32 %v225, 0.0
    %v230 = vmax.f32 %v227, 0.0
    %v231 = vpack.c.bf16 %v230, %v229
    %v232 = vld [vmem:[%s7] sm:$0xf]
    %v233 = vld [vmem:[%s7 + $0x4] sm:$0xf]
    %v234 = vld [vmem:[%s7 + $0x8] sm:$0xf]
    %v235 = vld [vmem:[%s7 + $0xc] sm:$0xf]
    %v236 = vld [vmem:[%s7 + $0x10] sm:$0xf]
    %v237 = vld [vmem:[%s7 + $0x14] sm:$0xf]
    %v238 = vld [vmem:[%s7 + $0x18] sm:$0xf]
    %v239 = vld [vmem:[%s7 + $0x1c] sm:$0xf]
    %v240 = vld [vmem:[%s7 + $0x20] sm:$0xf]
    %v241 = vld [vmem:[%s7 + $0x24] sm:$0xf]
    %v242 = vld [vmem:[%s7 + $0x28] sm:$0xf]
    %v243 = vld [vmem:[%s7 + $0x2c] sm:$0xf]
    %v244 = vld [vmem:[%s7 + $0x30] sm:$0xf]
    %v245 = vld [vmem:[%s7 + $0x34] sm:$0xf]
    %v246 = vld [vmem:[%s7 + $0x38] sm:$0xf]
    %v247 = vld [vmem:[%s7 + $0x3c] sm:$0xf]
    %v248 = vld [vmem:[%s8] sm:$0x1]
    %v250 = vperm.slane %v248, 0
    %v268 = vunpack.c.l.b16 %v232
    %v269 = vunpack.c.l.b16 %v233
    %v270 = vunpack.c.l.b16 %v234
    %v271 = vunpack.c.l.b16 %v235
    %v272 = vunpack.c.l.b16 %v236
    %v273 = vunpack.c.l.b16 %v237
    %v274 = vunpack.c.l.b16 %v238
    %v275 = vunpack.c.l.b16 %v239
    %v276 = vunpack.c.l.b16 %v240
    %v277 = vunpack.c.l.b16 %v241
    %v278 = vunpack.c.l.b16 %v242
    %v279 = vunpack.c.l.b16 %v243
    %v280 = vunpack.c.l.b16 %v244
    %v281 = vunpack.c.l.b16 %v245
    %v282 = vunpack.c.l.b16 %v246
    %v283 = vunpack.c.l.b16 %v247
    %v284 = vpack.c.b16 %v269, %v268
    %v285 = vpack.c.b16 %v271, %v270
    %v286 = vpack.c.b16 %v273, %v272
    %v287 = vpack.c.b16 %v275, %v274
    %v288 = vpack.c.b16 %v277, %v276
    %v289 = vpack.c.b16 %v279, %v278
    %v290 = vpack.c.b16 %v281, %v280
    %v291 = vpack.c.b16 %v283, %v282
    %300 = vmatpush.bf16.msra.mxu0 %v291
    %301 = vmatpush.bf16.msra.mxu0 %v290
    %302 = vmatpush.bf16.msra.mxu0 %v289
    %303 = vmatpush.bf16.msra.mxu0 %v288
    %304 = vmatpush.bf16.msra.mxu0 %v287
    %305 = vmatpush.bf16.msra.mxu0 %v286
    %306 = vmatpush.bf16.msra.mxu0 %v285
    %307 = vmatpush.bf16.msra.mxu0 %v284
    %308 = vmatmul.bf16.gmra.mxu0 %v231
    %v309 = vpop.f32.mrf.mxu0
    %v310 = vadd.f32 %v250, %v309
    %v311 = vpop.f32.mrf.mxu0
    %v312 = vadd.f32 %v250, %v311
    %313 = vdwg.mxu0
    %v314 = vmax.f32 %v310, 0.0
    %v315 = vmax.f32 %v312, 0.0
    %v316 = vpack.c.bf16 %v315, %v314
    %v317 = vld [vmem:[%s9] sm:$0xf]
    %v319 = vsel %vm126, %v317, 0
    %v322 = vsel %vm126, %v316, 0
    %324 = vmatpush.bf16.xpose.msra.mxu0 0
    %325 = vmatpush.bf16.xpose.msra.mxu0 0
    %326 = vmatpush.bf16.xpose.msra.mxu0 0
    %327 = vmatpush.bf16.xpose.msra.mxu0 0
    %328 = vmatpush.bf16.xpose.msra.mxu0 0
    %329 = vmatpush.bf16.xpose.msra.mxu0 0
    %330 = vmatpush.bf16.xpose.msra.mxu0 0
    %331 = vmatpush.bf16.xpose.msra.mxu0 %v322
    %332 = vmatmul.bf16.gmra.mxu0 %v319
    %v333 = vpop.f32.mrf.mxu0
    %v334 = vadd.f32 0.0, %v333
    %v335 = vpop.f32.mrf.mxu0
    %336 = vdwg.mxu0
    %v337 = vld [vmem:[#allocation2] sm:$0x1]
    %339 = vset.pattern.permute.xlu0 0
    %340 = vperm.xlu0 %339, %v337
    %v341 = vpop.permute.xlu0 %340
    %v343 = vperm.slane %v341, 0
    %v344 = vadd.f32 %v334, %v343
    %vm345 = vcmask 122880
    %346 = vst.msk [vmem:[#allocation3] sm:$0x1] %vm345, %v344
    // Predicated region
    $region46: #{mine_forward.1} parent=1 // pred_check
      _
    $region47: #{mine_forward.1} parent=1 // pred_check_branch
      %348 = sbr.rel (0) target = $region49
    $region48: #{mine_forward.1} parent=1 // pred_region
      %350 = vsyncadd [#allocation4], 0
      %s352 = sshll.u32 [#allocation3], 4
      %s353 = int_to_ptr.vmem [resolvable:$true] %s352
      %s354 = sshll.u32 %s11, 4
      %s355 = int_to_ptr.hbm [resolvable:$true] %s354
      %357 = dma.vmem_to_hbm [thread:$0]  %s353, 16, %s355, [#allocation4]
    $region49: #{mine_forward.1} parent=1 // pred_fallthru
      _
    // Predicated region
    $region50: #{mine_forward.1} parent=1 // pred_check
      _
    $region51: #{mine_forward.1} parent=1 // pred_check_branch
      %359 = sbr.rel (0) target = $region53
    $region52: #{mine_forward.1} parent=1 // pred_region
      %361 = dma.done [#allocation4], 16
    $region53: #{mine_forward.1} parent=1 // pred_fallthru
      _
    %362 = vsyncpa [#allocation4], 1

</llo_original>
